<compile_context>
chip_gen: v6e
topology: v6e:2x2x1
jax: 0.10.0
libtpu: 0.0.40
codegen_flags: <defaults>
</compile_context>

<pallas_src>
import jax
import jax.numpy as jnp
from jax.experimental import pallas as pl
from jax.experimental.pallas import tpu as pltpu

MAX_SEQ_LEN = 16   # ScalarNet.max_seq_len


def _round_up(x, m):
    return (x + m - 1) // m * m


def _sigmoid(v):
    # Exact sigmoid identity; single EUP op per element, no inf intermediates.
    return 0.5 * jnp.tanh(0.5 * v) + 0.5


def scalarnet_kernel(x_ref, w1_ref, b1_ref, w2_ref, b2_ref, o_ref):
    """Fused: backbone Linear -> SiLU -> Linear(->1) -> sigmoid * (max_seq_len+1)."""
    x = x_ref[...]                                                   # (TB, D_in) bf16

    # Backbone Linear(D_in -> D_out): bf16 MXU matmul, f32 accumulation; bias in f32.
    h = jnp.dot(x, w1_ref[...], preferred_element_type=jnp.float32) + b1_ref[...]

    # SiLU in f32: VPU mul + EUP tanh.
    h = h * _sigmoid(h)

    # Head Linear(D_out -> 1) as VPU multiply + XLU lane reduction (avoids a 1-column
    # MXU pass and a padded (D_out, 128) weight tile).  b2 scalar lives in SMEM.
    y = jnp.sum(h * w2_ref[...], axis=-1, keepdims=True) + b2_ref[0, 0]   # (TB, 1) f32

    # Narrow (TB, 1) store; partial trailing blocks are masked by the pipeline.
    o_ref[...] = _sigmoid(y) * jnp.float32(MAX_SEQ_LEN + 1)


def _pick_tile(B, tile_b):
    if B <= 8:
        return 8
    # >= 2 grid steps so v7x's two TensorCores both get work; sublane-aligned.
    return min(tile_b, _round_up((B + 1) // 2, 8))


def scalar_net(x, w1, b1, w2_row, b2, *, tile_b=1024):
    """x: (B, D_in); w1: (D_in, D_out); b1: (1, D_out); w2_row: (1, D_out); b2: (1, 1)."""
    B, d_in = x.shape
    d_out = w1.shape[1]

    # bf16 streaming operands for DMA + MXU (accumulation stays f32 in-kernel).
    x = x.astype(jnp.bfloat16)
    w1 = w1.astype(jnp.bfloat16)

    tb = _pick_tile(B, tile_b)
    grid = (pl.cdiv(B, tb),)          # no jnp.pad copy; trailing block is masked

    cost = pl.CostEstimate(
        flops=2 * B * d_in * d_out + 6 * B * d_out + 4 * B,
        transcendentals=B * d_out + B,
        bytes_accessed=(B * d_in * 2          # x (bf16)
                        + d_in * d_out * 2    # w1 (bf16)
                        + 2 * d_out * 4       # b1 + w2 row (f32)
                        + 4                   # b2 scalar
                        + B * 4),             # narrow f32 output
    )

    out = pl.pallas_call(
        scalarnet_kernel,
        out_shape=jax.ShapeDtypeStruct((B, 1), jnp.float32),
        grid_spec=pltpu.PrefetchScalarGridSpec(
            num_scalar_prefetch=0,
            grid=grid,
            in_specs=[
                pl.BlockSpec((tb, d_in), lambda i: (i, 0)),      # x: tiled over batch
                pl.BlockSpec((d_in, d_out), lambda i: (0, 0)),   # w1: VMEM-resident
                pl.BlockSpec((1, d_out), lambda i: (0, 0)),      # b1: resident
                pl.BlockSpec((1, d_out), lambda i: (0, 0)),      # w2 row: resident
                pl.BlockSpec(memory_space=pltpu.MemorySpace.SMEM),  # b2 scalar in SMEM
            ],
            out_specs=pl.BlockSpec((tb, 1), lambda i: (i, 0)),   # narrow column output
        ),
        compiler_params=pltpu.CompilerParams(
            dimension_semantics=("parallel",),   # batch axis -> both TCs on v7x
            vmem_limit_bytes=32 * 1024 * 1024,   # respect v7x's smaller scoped budget
        ),
        cost_estimate=cost,
    )(x, w1, b1, w2_row, b2)

    return out   # (B, 1)


def reference(x, w1, b1, w2_row, b2):
    # Same bf16 quantization of the streaming operands as the kernel; everything else f32.
    xq = x.astype(jnp.bfloat16).astype(jnp.float32)
    w1q = w1.astype(jnp.bfloat16).astype(jnp.float32)
    h = xq @ w1q + b1
    h = h * jax.nn.sigmoid(h)
    y = h @ w2_row.T + b2
    return jax.nn.sigmoid(y) * (MAX_SEQ_LEN + 1)


if __name__ == "__main__":
    key = jax.random.PRNGKey(0)
    k_x, k_w1, k_b1, k_w2, k_b2 = jax.random.split(key, 5)

    # batch deliberately NOT a multiple of the 8-row tile -> exercises the padless
    # (cdiv-grid, masked trailing block) path; d_out=128 keeps h vregs lane-dense.
    B, D_IN, D_OUT = 10, 32, 128

    x = jax.random.normal(k_x, (B, D_IN), dtype=jnp.float32)
    # Deterministic synthetic parameters (roughly PyTorch-Linear-scaled).
    w1 = jax.random.normal(k_w1, (D_IN, D_OUT), dtype=jnp.float32) / jnp.sqrt(D_IN)
    b1 = jax.random.normal(k_b1, (1, D_OUT), dtype=jnp.float32) * 0.1
    # Head weight in PyTorch layout: nn.Linear(D_OUT, 1).weight has shape (1, D_OUT).
    w2 = jax.random.normal(k_w2, (1, D_OUT), dtype=jnp.float32) / jnp.sqrt(D_OUT)
    b2 = jax.random.normal(k_b2, (1, 1), dtype=jnp.float32) * 0.1

    out = scalar_net(x, w1, b1, w2, b2)
    out = jax.block_until_ready(out)

    ref = reference(x, w1, b1, w2, b2)
    assert out.shape == (B, 1), out.shape
    assert bool(jnp.all(jnp.isfinite(out)))          # checked on the returned (B, 1) only
    assert jnp.allclose(out, ref, atol=1e-3, rtol=1e-3), (out, ref)

    # TODO(synk): RMSNorm branch (norm=True) not emitted since the default ctor disables it.
    print("KERNEL_OK")
</pallas_src>

<mosaic_0001>
module attributes {stable_mosaic.version = 11 : i64} {
  func.func @scalarnet_kernel(%arg0: i32, %arg1: memref<8x32xbf16, #tpu.memory_space<vmem>>, %arg2: memref<32x128xbf16, #tpu.memory_space<vmem>>, %arg3: memref<1x128xf32, #tpu.memory_space<vmem>>, %arg4: memref<1x128xf32, #tpu.memory_space<vmem>>, %arg5: memref<1x1xf32, #tpu.memory_space<smem>>, %arg6: memref<8x1xf32, #tpu.memory_space<vmem>>) attributes {dimension_semantics = [#tpu.dimension_semantics<parallel>], iteration_bounds = array<i64: 2>, scalar_prefetch = 0 : i64, scratch_operands = 0 : i64, tpu.core_type = #tpu.core_type<tc>, window_params = [{transform_indices = @transform_0, window_bounds = array<i64: 8, 32>}, {pipeline_mode = #tpu.pipeline_mode<synchronous>, transform_indices = @transform_1, window_bounds = array<i64: 32, 128>}, {pipeline_mode = #tpu.pipeline_mode<synchronous>, transform_indices = @transform_2, window_bounds = array<i64: 1, 128>}, {pipeline_mode = #tpu.pipeline_mode<synchronous>, transform_indices = @transform_3, window_bounds = array<i64: 1, 128>}, {transform_indices = @transform_4, window_bounds = array<i64: 1, 1>}, {transform_indices = @transform_5, window_bounds = array<i64: 8, 1>}]} {
    %c0 = arith.constant 0 : index
    %c0_0 = arith.constant 0 : index
    %0 = vector.load %arg1[%c0, %c0_0] : memref<8x32xbf16, #tpu.memory_space<vmem>>, vector<8x32xbf16>
    %c0_1 = arith.constant 0 : index
    %c0_2 = arith.constant 0 : index
    %1 = vector.load %arg2[%c0_1, %c0_2] : memref<32x128xbf16, #tpu.memory_space<vmem>>, vector<32x128xbf16>
    %cst = arith.constant dense<0.000000e+00> : vector<8x128xf32>
    %2 = tpu.matmul %0, %1, %cst {dimension_numbers = #tpu.dot_dimension_numbers<[1], [0], [0], [1], [0, 0, 1, 1], [], []>} : vector<8x32xbf16>, vector<32x128xbf16>, vector<8x128xf32> -> vector<8x128xf32>
    %c0_3 = arith.constant 0 : index
    %c0_4 = arith.constant 0 : index
    %3 = vector.load %arg3[%c0_3, %c0_4] : memref<1x128xf32, #tpu.memory_space<vmem>>, vector<1x128xf32>
    %4 = vector.broadcast %3 : vector<1x128xf32> to vector<8x128xf32>
    %5 = arith.addf %2, %4 : vector<8x128xf32>
    %cst_5 = arith.constant 5.000000e-01 : f32
    %6 = vector.broadcast %cst_5 : f32 to vector<8x128xf32>
    %7 = arith.mulf %6, %5 : vector<8x128xf32>
    %8 = math.tanh %7 : vector<8x128xf32>
    %cst_6 = arith.constant 5.000000e-01 : f32
    %9 = vector.broadcast %cst_6 : f32 to vector<8x128xf32>
    %10 = arith.mulf %9, %8 : vector<8x128xf32>
    %cst_7 = arith.constant 5.000000e-01 : f32
    %11 = vector.broadcast %cst_7 : f32 to vector<8x128xf32>
    %12 = arith.addf %10, %11 : vector<8x128xf32>
    %13 = arith.mulf %5, %12 : vector<8x128xf32>
    %c0_8 = arith.constant 0 : index
    %c0_9 = arith.constant 0 : index
    %14 = vector.load %arg4[%c0_8, %c0_9] : memref<1x128xf32, #tpu.memory_space<vmem>>, vector<1x128xf32>
    %15 = vector.broadcast %14 : vector<1x128xf32> to vector<8x128xf32>
    %16 = arith.mulf %13, %15 : vector<8x128xf32>
    %cst_10 = arith.constant dense<0.000000e+00> : vector<8xf32>
    %17 = vector.multi_reduction <add>, %16, %cst_10 [1] : vector<8x128xf32> to vector<8xf32>
    %18 = vector.shape_cast %17 : vector<8xf32> to vector<8x1xf32>
    %c0_11 = arith.constant 0 : index
    %c0_12 = arith.constant 0 : index
    %19 = memref.load %arg5[%c0_11, %c0_12] : memref<1x1xf32, #tpu.memory_space<smem>>
    %20 = vector.broadcast %19 : f32 to vector<8x1xf32>
    %21 = arith.addf %18, %20 : vector<8x1xf32>
    %cst_13 = arith.constant 5.000000e-01 : f32
    %22 = vector.broadcast %cst_13 : f32 to vector<8x1xf32>
    %23 = arith.mulf %22, %21 : vector<8x1xf32>
    %24 = math.tanh %23 : vector<8x1xf32>
    %cst_14 = arith.constant 5.000000e-01 : f32
    %25 = vector.broadcast %cst_14 : f32 to vector<8x1xf32>
    %26 = arith.mulf %25, %24 : vector<8x1xf32>
    %cst_15 = arith.constant 5.000000e-01 : f32
    %27 = vector.broadcast %cst_15 : f32 to vector<8x1xf32>
    %28 = arith.addf %26, %27 : vector<8x1xf32>
    %cst_16 = arith.constant 1.700000e+01 : f32
    %29 = vector.broadcast %cst_16 : f32 to vector<8x1xf32>
    %30 = arith.mulf %28, %29 : vector<8x1xf32>
    %c0_17 = arith.constant 0 : index
    %c0_18 = arith.constant 0 : index
    %31 = vector.load %arg6[%c0_17, %c0_18] : memref<8x1xf32, #tpu.memory_space<vmem>>, vector<8x1xf32>
    tpu.vector_store %arg6[%c0_17, %c0_18], %30 {strides = array<i32>} : memref<8x1xf32, #tpu.memory_space<vmem>>, vector<8x1xf32>,
    return
  }
  func.func @transform_0(%arg0: i32) -> (i32, i32) {
    %c0_i32 = arith.constant 0 : i32
    %c0_i32_0 = arith.constant 0 : i32
    return %arg0, %c0_i32 : i32, i32
  }
  func.func @transform_1(%arg0: i32) -> (i32, i32) {
    %c0_i32 = arith.constant 0 : i32
    %c0_i32_0 = arith.constant 0 : i32
    %c0_i32_1 = arith.constant 0 : i32
    return %c0_i32, %c0_i32_0 : i32, i32
  }
  func.func @transform_2(%arg0: i32) -> (i32, i32) {
    %c0_i32 = arith.constant 0 : i32
    %c0_i32_0 = arith.constant 0 : i32
    %c0_i32_1 = arith.constant 0 : i32
    return %c0_i32, %c0_i32_0 : i32, i32
  }
  func.func @transform_3(%arg0: i32) -> (i32, i32) {
    %c0_i32 = arith.constant 0 : i32
    %c0_i32_0 = arith.constant 0 : i32
    %c0_i32_1 = arith.constant 0 : i32
    return %c0_i32, %c0_i32_0 : i32, i32
  }
  func.func @transform_4(%arg0: i32) -> (i32, i32) {
    %c0_i32 = arith.constant 0 : i32
    %c0_i32_0 = arith.constant 0 : i32
    %c0_i32_1 = arith.constant 0 : i32
    return %c0_i32, %c0_i32_0 : i32, i32
  }
  func.func @transform_5(%arg0: i32) -> (i32, i32) {
    %c0_i32 = arith.constant 0 : i32
    %c0_i32_0 = arith.constant 0 : i32
    return %arg0, %c0_i32 : i32, i32
  }
}

</mosaic_0001>

<llo_original>
// kernel: tpu_custom_call.1
$region0: #{tpu_custom_call.1}
  #allocation0 [shape = 'u32[]', space=smem, size = 0x4, offset = 0x4, fixed_abs, tag = 'smem constant byte address 0x4 - core index']
  #allocation1 [shape = 'u32[144,128]{1,0:T(1,128)}', space=vmem, size = 0x12000, scoped, tag = 'internal scratch']
  #allocation2 [shape = 'f32[1,1]{1,0:T(1,128)S(6)}', space=smem, size = 0x200, scoped, tag = 'scoped memory for tpu_custom_call.1']
  %s0 = inlined_call_operand.hbm [shape: bf16[10,32], index: 0, kind: input, shape index: {}]
  %s1 = inlined_call_operand.hbm [shape: bf16[32,128], index: 1, kind: input, shape index: {}]
  %s2 = inlined_call_operand.vmem [shape: f32[1,128], index: 2, kind: input, shape index: {}]
  %s3 = inlined_call_operand.vmem [shape: f32[1,128], index: 3, kind: input, shape index: {}]
  %s4 = inlined_call_operand.<no memory space> [shape: f32[1,1], index: 4, kind: input, shape index: {}]
  %s5 = inlined_call_operand.vmem [shape: f32[10,1], index: 5, kind: output, shape index: {}]
  %s6 = sld [smem:[#allocation0]]
  $region61: #{tpu_custom_call.1} parent=0
    _
  %s8 = ssub.s32 1, %s6
  %s9 = scalar_select 0, %s8, %s6
  %10 = sst [smem:[#allocation2]] %s4
  $region1: #{tpu_custom_call.1} parent=0
    #allocation3 [shape = 'u8[4096]{0}', space=vmem, size = 0x1000, scoped, tag = 'input window, operand 0']
    #allocation4 [shape = 's32[2]{0}', space=sflag, size = 0x8, scoped, tag = 'scoped memory for tpu_custom_call.1']
    #allocation5 [shape = 'u8[8192]{0}', space=vmem, size = 0x2000, scoped, tag = 'input window, operand 1, single buffered']
    #allocation6 [shape = 's32[1]{0}', space=sflag, size = 0x4, scoped, tag = 'scoped memory for tpu_custom_call.1']
    %11 = vsyncpa [#allocation4], 0
    %s12 = scalar_lea.sflag [#allocation4], 1
    %13 = vsyncpa %s12, 0
    %14 = vsyncpa [#allocation6], 0
    loop: start=0, step=1, limit=4
    $region2: #{tpu_custom_call.1} parent=1 // loop_pre_header
      _
    $region3: #{tpu_custom_call.1} parent=1 // loop_header
      %s16 = sphi 0, %s20
      %p17 = scmp.ge.s32.totalorder %s16, 4
      %s26 = sphi 0, %s28
      %s29 = sphi 0, %s26
      %s30 = sphi 0, %s29
      %s46 = sphi 0, %s30
      %s50 = sphi 0, %s50
      %s52 = sphi 0, %s50
      %s53 = sphi 0, %s52
      %s67 = sphi 0, %s53
      %s71 = sphi 0, %s71
      %s73 = sphi 0, %s71
      %s74 = sphi 0, %s73
      %s88 = sphi 0, %s74
      %s92 = sphi 0, %s92
      %s94 = sphi 0, %s92
      %s95 = sphi 0, %s94
      %s109 = sphi 0, %s95
      %s113 = sphi 0, %s113
      %s115 = sphi 0, %s113
      %s116 = sphi 0, %s115
      %s130 = sphi 0, %s116
      %s136 = sphi 0, %s138
      %s139 = sphi 0, %s136
      %s140 = sphi 0, %s139
      %s156 = sphi 0, %s140
    $region4: #{tpu_custom_call.1} parent=1 // loop_header_branch
      %19 = sbr.rel (%p17) target = $region8
    $region5: #{tpu_custom_call.1} parent=1 // loop_body
      %s21 = ssub.s32 %s16, 1
      %s22 = ssub.s32 %s16, 2
      %s23 = sadd.s32 %s16, 1
      %s24 = ssub.s32 %s16, %s23
      %p25 = scmp.eq.s32.totalorder %s24, 0
      %s27 = sadd.s32 %s26, 1
      %s28 = scalar_select %p25, %s26, %s27
      %p31 = pneg %p25
      %p32 = scmp.eq.s32.totalorder %s16, 1
      %p33 = por %p31, %p32
      %p34 = scmp.ne.s32.totalorder %s26, %s29
      %p35 = scmp.eq.s32.totalorder %s16, 0
      %p36 = por %p34, %p35
      %p37 = scmp.ne.s32.totalorder %s26, %s29
      %p38 = scmp.eq.s32.totalorder %s21, 1
      %p39 = por %p37, %p38
      %p40 = scmp.ne.s32.totalorder %s29, %s30
      %p41 = scmp.eq.s32.totalorder %s21, 0
      %p42 = por %p40, %p41
      %p43 = scmp.ne.s32.totalorder %s29, %s30
      %p44 = scmp.eq.s32.totalorder %s22, 1
      %p45 = por %p43, %p44
      %p47 = scmp.ne.s32.totalorder %s30, %s46
      %p48 = scmp.eq.s32.totalorder %s22, 0
      %p49 = por %p47, %p48
      %s51 = sadd.s32 %s50, 1
      %p54 = scmp.eq.s32.totalorder %s16, 1
      %p55 = scmp.ne.s32.totalorder %s50, %s52
      %p56 = scmp.eq.s32.totalorder %s16, 0
      %p57 = por %p55, %p56
      %p58 = scmp.ne.s32.totalorder %s50, %s52
      %p59 = scmp.eq.s32.totalorder %s21, 1
      %p60 = por %p58, %p59
      %p61 = scmp.ne.s32.totalorder %s52, %s53
      %p62 = scmp.eq.s32.totalorder %s21, 0
      %p63 = por %p61, %p62
      %p64 = scmp.ne.s32.totalorder %s52, %s53
      %p65 = scmp.eq.s32.totalorder %s22, 1
      %p66 = por %p64, %p65
      %p68 = scmp.ne.s32.totalorder %s53, %s67
      %p69 = scmp.eq.s32.totalorder %s22, 0
      %p70 = por %p68, %p69
      %s72 = sadd.s32 %s71, 1
      %p75 = scmp.eq.s32.totalorder %s16, 1
      %p76 = scmp.ne.s32.totalorder %s71, %s73
      %p77 = scmp.eq.s32.totalorder %s16, 0
      %p78 = por %p76, %p77
      %p79 = scmp.ne.s32.totalorder %s71, %s73
      %p80 = scmp.eq.s32.totalorder %s21, 1
      %p81 = por %p79, %p80
      %p82 = scmp.ne.s32.totalorder %s73, %s74
      %p83 = scmp.eq.s32.totalorder %s21, 0
      %p84 = por %p82, %p83
      %p85 = scmp.ne.s32.totalorder %s73, %s74
      %p86 = scmp.eq.s32.totalorder %s22, 1
      %p87 = por %p85, %p86
      %p89 = scmp.ne.s32.totalorder %s74, %s88
      %p90 = scmp.eq.s32.totalorder %s22, 0
      %p91 = por %p89, %p90
      %s93 = sadd.s32 %s92, 1
      %p96 = scmp.eq.s32.totalorder %s16, 1
      %p97 = scmp.ne.s32.totalorder %s92, %s94
      %p98 = scmp.eq.s32.totalorder %s16, 0
      %p99 = por %p97, %p98
      %p100 = scmp.ne.s32.totalorder %s92, %s94
      %p101 = scmp.eq.s32.totalorder %s21, 1
      %p102 = por %p100, %p101
      %p103 = scmp.ne.s32.totalorder %s94, %s95
      %p104 = scmp.eq.s32.totalorder %s21, 0
      %p105 = por %p103, %p104
      %p106 = scmp.ne.s32.totalorder %s94, %s95
      %p107 = scmp.eq.s32.totalorder %s22, 1
      %p108 = por %p106, %p107
      %p110 = scmp.ne.s32.totalorder %s95, %s109
      %p111 = scmp.eq.s32.totalorder %s22, 0
      %p112 = por %p110, %p111
      %s114 = sadd.s32 %s113, 1
      %p117 = scmp.eq.s32.totalorder %s16, 1
      %p118 = scmp.ne.s32.totalorder %s113, %s115
      %p119 = scmp.eq.s32.totalorder %s16, 0
      %p120 = por %p118, %p119
      %p121 = scmp.ne.s32.totalorder %s113, %s115
      %p122 = scmp.eq.s32.totalorder %s21, 1
      %p123 = por %p121, %p122
      %p124 = scmp.ne.s32.totalorder %s115, %s116
      %p125 = scmp.eq.s32.totalorder %s21, 0
      %p126 = por %p124, %p125
      %p127 = scmp.ne.s32.totalorder %s115, %s116
      %p128 = scmp.eq.s32.totalorder %s22, 1
      %p129 = por %p127, %p128
      %p131 = scmp.ne.s32.totalorder %s116, %s130
      %p132 = scmp.eq.s32.totalorder %s22, 0
      %p133 = por %p131, %p132
      %s134 = ssub.s32 %s16, %s23
      %p135 = scmp.eq.s32.totalorder %s134, 0
      %s137 = sadd.s32 %s136, 1
      %s138 = scalar_select %p135, %s136, %s137
      %p141 = pneg %p135
      %p142 = scmp.eq.s32.totalorder %s16, 1
      %p143 = por %p141, %p142
      %p144 = scmp.ne.s32.totalorder %s136, %s139
      %p145 = scmp.eq.s32.totalorder %s16, 0
      %p146 = por %p144, %p145
      %p147 = scmp.ne.s32.totalorder %s136, %s139
      %p148 = scmp.eq.s32.totalorder %s21, 1
      %p149 = por %p147, %p148
      %p150 = scmp.ne.s32.totalorder %s139, %s140
      %p151 = scmp.eq.s32.totalorder %s21, 0
      %p152 = por %p150, %p151
      %p153 = scmp.ne.s32.totalorder %s139, %s140
      %p154 = scmp.eq.s32.totalorder %s22, 1
      %p155 = por %p153, %p154
      %p157 = scmp.ne.s32.totalorder %s140, %s156
      %p158 = scmp.eq.s32.totalorder %s22, 0
      %p159 = por %p157, %p158
      %p160 = scmp.le.s32.totalorder 1, %s16
      %p161 = scmp.lt.s32.totalorder %s16, 3
      %p162 = pnand %p160, %p161
      %p163 = pneg %p162
      // Predicated region
      $region9: #{tpu_custom_call.1} parent=5 // pred_check
        _
      $region10: #{tpu_custom_call.1} parent=5 // pred_check_branch
        %165 = sbr.rel (%p162) target = $region12
      $region11: #{tpu_custom_call.1} parent=5 // pred_region
        %s166 = ssub.s32 %s16, 1
        // Predicated region
        $region13: #{tpu_custom_call.1} parent=11 // pred_check
          %p167 = pneg %p63
        $region14: #{tpu_custom_call.1} parent=11 // pred_check_branch
          %169 = sbr.rel (%p167) target = $region16
        $region15: #{tpu_custom_call.1} parent=11 // pred_region
          %s171 = ssub.s32 256, 256
          %172 = vsyncadd [#allocation6], %s171
          %s173 = sshll.u32 [#allocation5], 4
          %s174 = int_to_ptr.vmem [resolvable:$true] %s173
          %179 = dma.hbm_to_vmem [thread:$0]  %s1, 256, %s174, [#allocation6], 64, 64, 4
        $region16: #{tpu_custom_call.1} parent=11 // pred_fallthru
          _
        // Predicated region
        $region17: #{tpu_custom_call.1} parent=11 // pred_check
          %p180 = pneg %p84
        $region18: #{tpu_custom_call.1} parent=11 // pred_check_branch
          %182 = sbr.rel (%p180) target = $region20
        $region19: #{tpu_custom_call.1} parent=11 // pred_region
          _
        $region20: #{tpu_custom_call.1} parent=11 // pred_fallthru
          _
        // Predicated region
        $region21: #{tpu_custom_call.1} parent=11 // pred_check
          %p183 = pneg %p105
        $region22: #{tpu_custom_call.1} parent=11 // pred_check_branch
          %185 = sbr.rel (%p183) target = $region24
        $region23: #{tpu_custom_call.1} parent=11 // pred_region
          _
        $region24: #{tpu_custom_call.1} parent=11 // pred_fallthru
          _
        // Predicated region
        $region25: #{tpu_custom_call.1} parent=11 // pred_check
          %p186 = pneg %p126
        $region26: #{tpu_custom_call.1} parent=11 // pred_check_branch
          %188 = sbr.rel (%p186) target = $region28
        $region27: #{tpu_custom_call.1} parent=11 // pred_region
          _
        $region28: #{tpu_custom_call.1} parent=11 // pred_fallthru
          _
      $region12: #{tpu_custom_call.1} parent=5 // pred_fallthru
        _
      %p189 = scmp.lt.s32.totalorder %s16, 2
      // Predicated region
      $region29: #{tpu_custom_call.1} parent=5 // pred_check
        %p190 = pneg %p189
      $region30: #{tpu_custom_call.1} parent=5 // pred_check_branch
        %192 = sbr.rel (%p190) target = $region32
      $region31: #{tpu_custom_call.1} parent=5 // pred_region
        // Predicated region
        $region33: #{tpu_custom_call.1} parent=31 // pred_check
          %p193 = pneg %p36
        $region34: #{tpu_custom_call.1} parent=31 // pred_check_branch
          %195 = sbr.rel (%p193) target = $region36
        $region35: #{tpu_custom_call.1} parent=31 // pred_region
          %s196 = sand.u32 %s26, 1
          %s197 = scalar_lea.sflag [#allocation4], %s196
          %s198 = sand.u32 %s26, 1
          %s199 = smul.addr %s198, 4
          %s200 = scalar_lea.vmem [#allocation3], %s199
          %s202 = ssub.s32 64, 64
          %203 = vsyncadd %s197, %s202
          %s204 = smul.addr %s16, 64
          %s205 = scalar_lea.hbm %s0, %s204
          %s207 = sshll.u32 %s200, 4
          %s208 = int_to_ptr.vmem [resolvable:$true] %s207
          %210 = dma.hbm_to_vmem [thread:$0]  %s205, 64, %s208, %s197
        $region36: #{tpu_custom_call.1} parent=31 // pred_fallthru
          _
      $region32: #{tpu_custom_call.1} parent=5 // pred_fallthru
        _
      %p211 = scmp.le.s32.totalorder 1, %s16
      %p212 = scmp.lt.s32.totalorder %s16, 3
      %p213 = pnand %p211, %p212
      %p214 = pneg %p213
      // Predicated region
      $region37: #{tpu_custom_call.1} parent=5 // pred_check
        _
      $region38: #{tpu_custom_call.1} parent=5 // pred_check_branch
        %216 = sbr.rel (%p213) target = $region40
      $region39: #{tpu_custom_call.1} parent=5 // pred_region
        %s217 = ssub.s32 %s16, 1
        %s218 = sand.u32 %s29, 1
        %s219 = scalar_lea.sflag [#allocation4], %s218
        %s220 = sand.u32 %s29, 1
        %s221 = smul.addr %s220, 4
        %s222 = scalar_lea.vmem [#allocation3], %s221
        // Predicated region
        $region41: #{tpu_custom_call.1} parent=39 // pred_check
          %p223 = pneg %p42
        $region42: #{tpu_custom_call.1} parent=39 // pred_check_branch
          %225 = sbr.rel (%p223) target = $region44
        $region43: #{tpu_custom_call.1} parent=39 // pred_region
          %226 = dma.done %s219, 64
        $region44: #{tpu_custom_call.1} parent=39 // pred_fallthru
          _
        // Predicated region
        $region45: #{tpu_custom_call.1} parent=39 // pred_check
          %p227 = pneg %p63
        $region46: #{tpu_custom_call.1} parent=39 // pred_check_branch
          %229 = sbr.rel (%p227) target = $region48
        $region47: #{tpu_custom_call.1} parent=39 // pred_region
          %230 = dma.done [#allocation6], 256
        $region48: #{tpu_custom_call.1} parent=39 // pred_fallthru
          _
        %s231 = sand.u32 %s29, 1
        %s232 = scalar_lea.sflag [#allocation4], %s231
        %s233 = sand.u32 %s29, 1
        %s234 = smul.addr %s233, 4
        %s235 = scalar_lea.vmem [#allocation3], %s234
        %p236 = pneg %p42
        %p237 = pneg %p39
        %p238 = pneg %p63
        %p239 = pneg %p60
        %p240 = pneg %p84
        %p241 = pneg %p81
        %p242 = pneg %p105
        %p243 = pneg %p102
        %p244 = pneg %p126
        %p245 = pneg %p123
        %p246 = pneg %p152
        %p247 = pneg %p149
        %p248 = scmp.lt.s32.totalorder %s21, 1
        %s249 = scalar_select %p248, %s21, 1
        %s250 = smul.addr %s249, 8
        %s251 = scalar_lea.vmem %s5, %s250
        %p252 = scmp.lt.s32.totalorder %s21, 1
        %s253 = scalar_select %p252, %s21, 1
        %s254 = smul.addr %s253, 8
        %s255 = scalar_lea.vmem %s5, %s254
        %v257 = vld [vmem:[%s222] sm:$0xf]
        %v258 = vld [vmem:[#allocation5] sm:$0xf]
        %v259 = vld [vmem:[#allocation5 + $0x4] sm:$0xf]
        %v260 = vld [vmem:[#allocation5 + $0x8] sm:$0xf]
        %v261 = vld [vmem:[#allocation5 + $0xc] sm:$0xf]
        %v262 = vld [vmem:[%s2] sm:$0x1]
        %v264 = vlaneseq
        %v265 = vshrl.u32 %v264, 7
        %v266 = vsub.s32 0, %v265
        %v267 = vrot.slane %v262, %v266
        %v273 = vunpack.c.l.b16 %v258
        %v274 = vunpack.c.l.b16 %v259
        %v275 = vunpack.c.l.b16 %v260
        %v276 = vunpack.c.l.b16 %v261
        %v277 = vpack.c.b16 %v274, %v273
        %v278 = vpack.c.b16 %v276, %v275
        %vm281 = vcmask 261120
        %v283 = vsel %vm281, %v257, 0
        %285 = vmatprep.subr.bf16.mxu0 0
        %286 = vmatpush1.bf16.msra.mxu0 0
        %287 = vmatprep.subr.bf16.mxu0 0
        %288 = vmatpush1.bf16.msra.mxu0 0
        %289 = vmatprep.subr.bf16.mxu0 0
        %290 = vmatpush1.bf16.msra.mxu0 0
        %291 = vmatprep.subr.bf16.mxu0 0
        %292 = vmatpush1.bf16.msra.mxu0 0
        %293 = vmatprep.subr.bf16.mxu0 0
        %294 = vmatpush1.bf16.msra.mxu0 0
        %295 = vmatprep.subr.bf16.mxu0 0
        %296 = vmatpush1.bf16.msra.mxu0 0
        %297 = vmatprep.subr.bf16.mxu0 0
        %298 = vmatpush1.bf16.msra.mxu0 %v278
        %299 = vmatprep.subr.bf16.mxu0 0
        %300 = vmatpush1.bf16.msra.mxu0 %v277
        %301 = vmatprep.subr.bf16.mxu0 0
        %302 = vmatpush2.bf16.msra.mxu0 0
        %303 = vmatprep.subr.bf16.mxu0 0
        %304 = vmatpush2.bf16.msra.mxu0 0
        %305 = vmatprep.subr.bf16.mxu0 0
        %306 = vmatpush2.bf16.msra.mxu0 0
        %307 = vmatprep.subr.bf16.mxu0 0
        %308 = vmatpush2.bf16.msra.mxu0 0
        %309 = vmatprep.subr.bf16.mxu0 0
        %310 = vmatpush2.bf16.msra.mxu0 0
        %311 = vmatprep.subr.bf16.mxu0 0
        %312 = vmatpush2.bf16.msra.mxu0 0
        %313 = vmatprep.subr.bf16.mxu0 0
        %314 = vmatpush2.bf16.msra.mxu0 0
        %315 = vmatprep.subr.bf16.mxu0 0
        %316 = vmatpush2.bf16.msra.mxu0 0
        %317 = vmatprep.mubr.bf16.mxu0 0
        %318 = vmatmul.mubr.bf16.gmra.mxu0 %v283
        %v319 = vpop.f32.mrf.mxu0
        %v320 = vadd.f32 %v267, %v319
        %v321 = vpop.f32.mrf.mxu0
        %v322 = vpop.f32.mrf.mxu0
        %v323 = vpop.f32.mrf.mxu0
        %324 = vdwg.mxu0
        %v325 = vmul.f32 %v320, 0.5
        %v326 = vtanh.pop %v325
        %v327 = vmul.f32 %v326, 0.5
        %v328 = vadd.f32 %v327, 0.5
        %v329 = vmul.f32 %v320, %v328
        %v330 = vld [vmem:[%s3] sm:$0x1]
        %v332 = vlaneseq
        %v333 = vshrl.u32 %v332, 7
        %v334 = vsub.s32 0, %v333
        %v335 = vrot.slane %v330, %v334
        %v337 = vmul.f32 %v329, %v335
        %338 = vadd.xlane.f32.xlu0 %v337
        %v339 = vpop.xlane.xlu0 %338
        %s340 = sld [smem:[#allocation2]]
        %v341 = vstv %s340
        %v342 = vadd.f32 %v339, %v341
        %v343 = vmul.f32 %v342, 0.5
        %v344 = vtanh.pop %v343
        %v345 = vmul.f32 %v344, 0.5
        %v346 = vadd.f32 %v345, 0.5
        %v347 = vmul.f32 %v346, 17.0
        %vm348 = vcmask 7168
        %349 = vst.msk [vmem:[%s255] sm:$0xff] %vm348, %v347
        %p350 = scmp.lt.s32.totalorder %s21, 1
        %s351 = scalar_select %p350, %s21, 1
        %s352 = smul.addr %s351, 8
        %s353 = scalar_lea.vmem %s5, %s352
        // Predicated region
        $region49: #{tpu_custom_call.1} parent=39 // pred_check
          %p354 = pneg %p149
        $region50: #{tpu_custom_call.1} parent=39 // pred_check_branch
          %356 = sbr.rel (%p354) target = $region52
        $region51: #{tpu_custom_call.1} parent=39 // pred_region
          _
        $region52: #{tpu_custom_call.1} parent=39 // pred_fallthru
          _
      $region40: #{tpu_custom_call.1} parent=5 // pred_fallthru
        _
      %p357 = scmp.le.s32.totalorder 2, %s16
      // Predicated region
      $region53: #{tpu_custom_call.1} parent=5 // pred_check
        %p358 = pneg %p357
      $region54: #{tpu_custom_call.1} parent=5 // pred_check_branch
        %360 = sbr.rel (%p358) target = $region56
      $region55: #{tpu_custom_call.1} parent=5 // pred_region
        %s361 = ssub.s32 %s16, 2
        // Predicated region
        $region57: #{tpu_custom_call.1} parent=55 // pred_check
          %p362 = pneg %p155
        $region58: #{tpu_custom_call.1} parent=55 // pred_check_branch
          %364 = sbr.rel (%p362) target = $region60
        $region59: #{tpu_custom_call.1} parent=55 // pred_region
          %p365 = scmp.lt.s32.totalorder %s22, 1
          %s366 = scalar_select %p365, %s22, 1
          %s367 = smul.addr %s366, 8
          %s368 = scalar_lea.vmem %s5, %s367
        $region60: #{tpu_custom_call.1} parent=55 // pred_fallthru
          _
      $region56: #{tpu_custom_call.1} parent=5 // pred_fallthru
        _
    $region6: #{tpu_custom_call.1} parent=1 // loop_footer
      %s20 = sadd.s32 1, %s16
    $region7: #{tpu_custom_call.1} parent=1 // loop_footer_branch
      %15 = sbr.rel target = $region3
    $region8: #{tpu_custom_call.1} parent=1 // loop_exit
      _
    %369 = vsyncpa [#allocation4], 1
    %s370 = scalar_lea.sflag [#allocation4], 1
    %371 = vsyncpa %s370, 1
    %372 = vsyncpa [#allocation6], 1

</llo_original>
